<compile_context>
chip_gen: v5e
topology: v5e:2x2
jax: 0.10.0
libtpu: 0.0.40
codegen_flags: <defaults>
</compile_context>

<pallas_src>
import jax
import jax.numpy as jnp
import numpy as np
from jax.experimental import pallas as pl
from jax.experimental.pallas import tpu as pltpu


def _round_up(n, m):
    return ((n + m - 1) // m) * m


# ----------------------------------------------------------------------------
# Pallas kernel: one bf16 matmul (patches x folded weights) + bias + SiLU.
#   x_ref: (1, RB, P)        bf16 im2col patch rows for this (batch, row-block)
#   w_ref: (P, Cout_pad)     bf16 BN-folded weights (Cout padded to mult of 128)
#   b_ref: (1, Cout_pad)     f32 BN-folded bias
#   o_ref: (1, RB, Cout_pad) f32 output rows (lane-dense)
# ----------------------------------------------------------------------------
def _matmul_bias_silu_kernel(x_ref, w_ref, b_ref, o_ref):
    acc = jnp.dot(x_ref[0], w_ref[...],
                  preferred_element_type=jnp.float32)          # (RB, Cout_pad) f32
    y = acc + b_ref[...]                                        # folded BN bias
    sig = pl.reciprocal(1.0 + jnp.exp(-y), approx=False)        # f32 sigmoid
    o_ref[0] = (y * sig).astype(o_ref.dtype)                    # SiLU


# ----------------------------------------------------------------------------
# Wrapper: Conv(c1, c2, k, s, autopad(k), g=1, act=True).forward
# ----------------------------------------------------------------------------
def conv_bn_silu(x, weight, gamma, beta, running_mean, running_var,
                 *, k, stride=1, padding=None, eps=1e-3, row_block_hint=512):
    """x: (B, Cin, H, W) NCHW float32; weight: (Cout, Cin, k, k) OIHW."""
    if padding is None:
        padding = k // 2                                        # autopad
    B, Cin, H, W = x.shape
    Cout = weight.shape[0]
    KH = KW = k
    Hout = (H + 2 * padding - KH) // stride + 1
    Wout = (W + 2 * padding - KW) // stride + 1
    rows = Hout * Wout
    P = KH * KW * Cin

    # ---- Fold BatchNorm (running stats) into the conv weight and a bias. ----
    scale = gamma / jnp.sqrt(running_var + eps)
    w_f = weight * scale[:, None, None, None]                   # OIHW, scaled
    bias = beta - running_mean * scale                          # (Cout,)

    # ---- Lane-dense weights/bias: pad Cout to a multiple of 128, bf16 MXU RHS.
    Cout_pad = _round_up(Cout, 128)
    w_mat = jnp.transpose(w_f, (2, 3, 1, 0)).reshape(P, Cout)   # (kh,kw,cin)-major
    # pad contraction dim to a multiple of 8 (clean sublane layout for bf16 RHS)
    P_pad = _round_up(P, 8)
    w_mat = jnp.pad(w_mat, ((0, P_pad - P), (0, Cout_pad - Cout))).astype(jnp.bfloat16)
    bias_pad = jnp.pad(bias, (0, Cout_pad - Cout)).reshape(1, Cout_pad).astype(jnp.float32)

    # ---- Host-side im2col (layout only): stride applied here so the kernel
    #      computes only the needed output rows; tap order matches w_mat.
    x_nhwc = jnp.transpose(x, (0, 2, 3, 1))
    if padding > 0:
        x_nhwc = jnp.pad(x_nhwc,
                         ((0, 0), (padding, padding), (padding, padding), (0, 0)))
    taps = []
    for kh in range(KH):
        for kw in range(KW):
            taps.append(x_nhwc[:,
                               kh:kh + stride * (Hout - 1) + 1:stride,
                               kw:kw + stride * (Wout - 1) + 1:stride, :])
    patches = taps[0] if len(taps) == 1 else jnp.concatenate(taps, axis=-1)
    patches = patches.reshape(B, rows, P)
    if P_pad != P:
        patches = jnp.pad(patches, ((0, 0), (0, 0), (0, P_pad - P)))

    # ---- Row-block tiling (keeps the f32 accumulator small / in vregs). ----
    row_block = min(row_block_hint, _round_up(rows, 8))
    rows_pad = _round_up(rows, row_block)
    if rows_pad != rows:
        patches = jnp.pad(patches, ((0, 0), (0, rows_pad - rows), (0, 0)))
    patches = patches.astype(jnp.bfloat16)                      # bf16 MXU LHS

    grid = (B, rows_pad // row_block)
    out = pl.pallas_call(
        _matmul_bias_silu_kernel,
        out_shape=jax.ShapeDtypeStruct((B, rows_pad, Cout_pad), jnp.float32),
        grid=grid,
        in_specs=[
            pl.BlockSpec((1, row_block, P_pad), lambda b, r: (b, r, 0)),
            pl.BlockSpec((P_pad, Cout_pad), lambda b, r: (0, 0)),
            pl.BlockSpec((1, Cout_pad), lambda b, r: (0, 0)),
        ],
        out_specs=pl.BlockSpec((1, row_block, Cout_pad), lambda b, r: (b, r, 0)),
        compiler_params=pltpu.CompilerParams(
            dimension_semantics=("parallel", "parallel")),
    )(patches, w_mat, bias_pad)

    # Drop Cout / row padding (host-side layout only), back to NCHW.
    y = out[:, :rows, :Cout].reshape(B, Hout, Wout, Cout)
    return jnp.transpose(y, (0, 3, 1, 2))


# ----------------------------------------------------------------------------
# Pure-JAX f32 reference of the same math (correctness check).
# ----------------------------------------------------------------------------
def ref_conv_bn_silu(x, weight, gamma, beta, running_mean, running_var,
                     stride, padding, eps=1e-3):
    y = jax.lax.conv_general_dilated(
        x, weight, window_strides=(stride, stride),
        padding=[(padding, padding), (padding, padding)],
        dimension_numbers=('NCHW', 'OIHW', 'NCHW'))
    scale = gamma / jnp.sqrt(running_var + eps)
    y = y * scale[None, :, None, None] + (beta - running_mean * scale)[None, :, None, None]
    return y * jax.nn.sigmoid(y)


if __name__ == "__main__":
    key = jax.random.PRNGKey(0)
    B, C1, H, W = 2, 4, 16, 16
    kx, kp = jax.random.split(key)
    x = jax.random.normal(kx, (B, C1, H, W), jnp.float32)

    fused = jax.jit(conv_bn_silu,
                    static_argnames=('k', 'stride', 'padding', 'eps', 'row_block_hint'))

    # Conv() default (k=1, s=1), a typical YOLO 3x3/s1, and a 3x3/s2 downsample.
    configs = [dict(c2=8, k=1, s=1), dict(c2=8, k=3, s=1), dict(c2=16, k=3, s=2)]
    for i, cfg in enumerate(configs):
        c2, k, s = cfg['c2'], cfg['k'], cfg['s']
        ks = jax.random.split(jax.random.fold_in(kp, i), 5)
        w = jax.random.normal(ks[0], (c2, C1, k, k), jnp.float32) * 0.1
        gamma = 0.5 + jax.random.uniform(ks[1], (c2,), jnp.float32)
        beta = jax.random.normal(ks[2], (c2,), jnp.float32) * 0.1
        mean = jax.random.normal(ks[3], (c2,), jnp.float32) * 0.1
        var = 0.5 + jax.random.uniform(ks[4], (c2,), jnp.float32)

        out = fused(x, w, gamma, beta, mean, var, k=k, stride=s)
        out = jax.block_until_ready(out)

        ref = ref_conv_bn_silu(x, w, gamma, beta, mean, var, s, k // 2)
        # bf16 MXU inputs -> compare to the f32 reference with bf16-level tolerance.
        np.testing.assert_allclose(np.asarray(out), np.asarray(ref),
                                   rtol=5e-2, atol=5e-2)

    print("KERNEL_OK")
</pallas_src>

<mosaic_0001>
module attributes {stable_mosaic.version = 11 : i64} {
  func.func @_matmul_bias_silu_kernel(%arg0: i32, %arg1: i32, %arg2: memref<1x256x8xbf16, #tpu.memory_space<vmem>>, %arg3: memref<8x128xbf16, #tpu.memory_space<vmem>>, %arg4: memref<1x128xf32, #tpu.memory_space<vmem>>, %arg5: memref<1x256x128xf32, #tpu.memory_space<vmem>>) attributes {dimension_semantics = [#tpu.dimension_semantics<parallel>, #tpu.dimension_semantics<parallel>], iteration_bounds = array<i64: 2, 1>, scalar_prefetch = 0 : i64, scratch_operands = 0 : i64, tpu.core_type = #tpu.core_type<tc>, window_params = [{transform_indices = @transform_0, window_bounds = array<i64: 1, 256, 8>}, {pipeline_mode = #tpu.pipeline_mode<synchronous>, transform_indices = @transform_1, window_bounds = array<i64: 8, 128>}, {pipeline_mode = #tpu.pipeline_mode<synchronous>, transform_indices = @transform_2, window_bounds = array<i64: 1, 128>}, {transform_indices = @transform_3, window_bounds = array<i64: 1, 256, 128>}]} {
    %c0 = arith.constant 0 : index
    %c0_0 = arith.constant 0 : index
    %c0_1 = arith.constant 0 : index
    %0 = vector.load %arg2[%c0, %c0_0, %c0_1] : memref<1x256x8xbf16, #tpu.memory_space<vmem>>, vector<1x256x8xbf16>
    %1 = vector.shape_cast %0 : vector<1x256x8xbf16> to vector<256x8xbf16>
    %c0_2 = arith.constant 0 : index
    %c0_3 = arith.constant 0 : index
    %2 = vector.load %arg3[%c0_2, %c0_3] : memref<8x128xbf16, #tpu.memory_space<vmem>>, vector<8x128xbf16>
    %cst = arith.constant dense<0.000000e+00> : vector<256x128xf32>
    %3 = tpu.matmul %1, %2, %cst {dimension_numbers = #tpu.dot_dimension_numbers<[1], [0], [0], [1], [0, 0, 1, 1], [], []>} : vector<256x8xbf16>, vector<8x128xbf16>, vector<256x128xf32> -> vector<256x128xf32>
    %c0_4 = arith.constant 0 : index
    %c0_5 = arith.constant 0 : index
    %4 = vector.load %arg4[%c0_4, %c0_5] : memref<1x128xf32, #tpu.memory_space<vmem>>, vector<1x128xf32>
    %5 = vector.broadcast %4 : vector<1x128xf32> to vector<256x128xf32>
    %6 = arith.addf %3, %5 : vector<256x128xf32>
    %cst_6 = arith.constant 0.000000e+00 : f32
    %7 = vector.broadcast %cst_6 : f32 to vector<256x128xf32>
    %8 = arith.subf %7, %6 : vector<256x128xf32>
    %9 = math.exp %8 : vector<256x128xf32>
    %cst_7 = arith.constant 1.000000e+00 : f32
    %10 = vector.broadcast %cst_7 : f32 to vector<256x128xf32>
    %11 = arith.addf %10, %9 : vector<256x128xf32>
    %12 = tpu.reciprocal %11 : vector<256x128xf32> -> vector<256x128xf32>
    %13 = arith.mulf %6, %12 : vector<256x128xf32>
    %c0_8 = arith.constant 0 : index
    %c0_9 = arith.constant 0 : index
    %c0_10 = arith.constant 0 : index
    %14 = vector.load %arg5[%c0_8, %c0_9, %c0_10] : memref<1x256x128xf32, #tpu.memory_space<vmem>>, vector<1x256x128xf32>
    %15 = vector.shape_cast %14 : vector<1x256x128xf32> to vector<256x128xf32>
    %16 = vector.shape_cast %13 : vector<256x128xf32> to vector<1x256x128xf32>
    tpu.vector_store %arg5[%c0_8, %c0_9, %c0_10], %16 {strides = array<i32>} : memref<1x256x128xf32, #tpu.memory_space<vmem>>, vector<1x256x128xf32>,
    return
  }
  func.func @transform_0(%arg0: i32, %arg1: i32) -> (i32, i32, i32) {
    %c0_i32 = arith.constant 0 : i32
    %c0_i32_0 = arith.constant 0 : i32
    return %arg0, %arg1, %c0_i32 : i32, i32, i32
  }
  func.func @transform_1(%arg0: i32, %arg1: i32) -> (i32, i32) {
    %c0_i32 = arith.constant 0 : i32
    %c0_i32_0 = arith.constant 0 : i32
    %c0_i32_1 = arith.constant 0 : i32
    return %c0_i32, %c0_i32_0 : i32, i32
  }
  func.func @transform_2(%arg0: i32, %arg1: i32) -> (i32, i32) {
    %c0_i32 = arith.constant 0 : i32
    %c0_i32_0 = arith.constant 0 : i32
    %c0_i32_1 = arith.constant 0 : i32
    return %c0_i32, %c0_i32_0 : i32, i32
  }
  func.func @transform_3(%arg0: i32, %arg1: i32) -> (i32, i32, i32) {
    %c0_i32 = arith.constant 0 : i32
    %c0_i32_0 = arith.constant 0 : i32
    return %arg0, %arg1, %c0_i32 : i32, i32, i32
  }
}

</mosaic_0001>

<llo_original>
// kernel: conv_bn_silu.1
$region0: #{conv_bn_silu.1}
  #allocation0 [shape = 'u32[]', space=smem, size = 0x4, offset = 0x4, fixed_abs, tag = 'smem constant byte address 0x4 - core index']
  #allocation1 [shape = 'u32[72,128]{1,0:T(1,128)}', space=vmem, size = 0x9000, scoped, tag = 'internal scratch']
  %s0 = inlined_call_operand.vmem [shape: bf16[2,256,8], index: 0, kind: input, shape index: {}]
  %s1 = inlined_call_operand.vmem [shape: bf16[8,128], index: 1, kind: input, shape index: {}]
  %s2 = inlined_call_operand.vmem [shape: f32[1,128], index: 2, kind: input, shape index: {}]
  %s3 = inlined_call_operand.vmem [shape: f32[2,256,128], index: 3, kind: output, shape index: {}]
  %s4 = sld [smem:[#allocation0]]
  $region45: #{conv_bn_silu.1} parent=0
    _
  %s6 = ssub.s32 1, %s4
  %s7 = scalar_select 0, %s6, %s4
  loop: start=0, step=1, limit=4
  $region2: #{conv_bn_silu.1} parent=0 // loop_pre_header
    _
  $region3: #{conv_bn_silu.1} parent=0 // loop_header
    %s9 = sphi 0, %s13
    %p10 = scmp.ge.s32.totalorder %s9, 4
    %s16 = sphi 0, %s28
    %s17 = sphi 0, %s24
    %s18 = sphi 0, %s16
    %s19 = sphi 0, %s17
    %s20 = sphi 0, %s18
    %s21 = sphi 0, %s19
    %s33 = sphi 0, %s35
    %s36 = sphi 0, %s33
    %s37 = sphi 0, %s36
    %s53 = sphi 0, %s37
    %s57 = sphi 0, %s57
    %s59 = sphi 0, %s57
    %s60 = sphi 0, %s59
    %s74 = sphi 0, %s60
    %s78 = sphi 0, %s78
    %s80 = sphi 0, %s78
    %s81 = sphi 0, %s80
    %s95 = sphi 0, %s81
    %s103 = sphi 0, %s105
    %s106 = sphi 0, %s103
    %s107 = sphi 0, %s106
    %s123 = sphi 0, %s107
  $region4: #{conv_bn_silu.1} parent=0 // loop_header_branch
    %12 = sbr.rel (%p10) target = $region8
  $region5: #{conv_bn_silu.1} parent=0 // loop_body
    %s14 = ssub.s32 %s9, 1
    %s15 = ssub.s32 %s9, 2
    %s22 = sadd.s32 1, %s17
    %p23 = scmp.ge.s32.totalorder %s22, 1
    %s24 = scalar_select %p23, 0, %s22
    %s25 = sadd.s32 1, %s16
    %s26 = scalar_select %p23, %s25, %s16
    %p27 = scmp.ge.s32.totalorder %s26, 2
    %s28 = scalar_select %p27, 0, %s26
    %s29 = ssub.s32 %s16, %s28
    %s30 = ssub.s32 %s17, %s24
    %s31 = sor.u32 %s29, %s30
    %p32 = scmp.eq.s32.totalorder %s31, 0
    %s34 = sadd.s32 %s33, 1
    %s35 = scalar_select %p32, %s33, %s34
    %p38 = pneg %p32
    %p39 = scmp.eq.s32.totalorder %s9, 1
    %p40 = por %p38, %p39
    %p41 = scmp.ne.s32.totalorder %s33, %s36
    %p42 = scmp.eq.s32.totalorder %s9, 0
    %p43 = por %p41, %p42
    %p44 = scmp.ne.s32.totalorder %s33, %s36
    %p45 = scmp.eq.s32.totalorder %s14, 1
    %p46 = por %p44, %p45
    %p47 = scmp.ne.s32.totalorder %s36, %s37
    %p48 = scmp.eq.s32.totalorder %s14, 0
    %p49 = por %p47, %p48
    %p50 = scmp.ne.s32.totalorder %s36, %s37
    %p51 = scmp.eq.s32.totalorder %s15, 1
    %p52 = por %p50, %p51
    %p54 = scmp.ne.s32.totalorder %s37, %s53
    %p55 = scmp.eq.s32.totalorder %s15, 0
    %p56 = por %p54, %p55
    %s58 = sadd.s32 %s57, 1
    %p61 = scmp.eq.s32.totalorder %s9, 1
    %p62 = scmp.ne.s32.totalorder %s57, %s59
    %p63 = scmp.eq.s32.totalorder %s9, 0
    %p64 = por %p62, %p63
    %p65 = scmp.ne.s32.totalorder %s57, %s59
    %p66 = scmp.eq.s32.totalorder %s14, 1
    %p67 = por %p65, %p66
    %p68 = scmp.ne.s32.totalorder %s59, %s60
    %p69 = scmp.eq.s32.totalorder %s14, 0
    %p70 = por %p68, %p69
    %p71 = scmp.ne.s32.totalorder %s59, %s60
    %p72 = scmp.eq.s32.totalorder %s15, 1
    %p73 = por %p71, %p72
    %p75 = scmp.ne.s32.totalorder %s60, %s74
    %p76 = scmp.eq.s32.totalorder %s15, 0
    %p77 = por %p75, %p76
    %s79 = sadd.s32 %s78, 1
    %p82 = scmp.eq.s32.totalorder %s9, 1
    %p83 = scmp.ne.s32.totalorder %s78, %s80
    %p84 = scmp.eq.s32.totalorder %s9, 0
    %p85 = por %p83, %p84
    %p86 = scmp.ne.s32.totalorder %s78, %s80
    %p87 = scmp.eq.s32.totalorder %s14, 1
    %p88 = por %p86, %p87
    %p89 = scmp.ne.s32.totalorder %s80, %s81
    %p90 = scmp.eq.s32.totalorder %s14, 0
    %p91 = por %p89, %p90
    %p92 = scmp.ne.s32.totalorder %s80, %s81
    %p93 = scmp.eq.s32.totalorder %s15, 1
    %p94 = por %p92, %p93
    %p96 = scmp.ne.s32.totalorder %s81, %s95
    %p97 = scmp.eq.s32.totalorder %s15, 0
    %p98 = por %p96, %p97
    %s99 = ssub.s32 %s16, %s28
    %s100 = ssub.s32 %s17, %s24
    %s101 = sor.u32 %s99, %s100
    %p102 = scmp.eq.s32.totalorder %s101, 0
    %s104 = sadd.s32 %s103, 1
    %s105 = scalar_select %p102, %s103, %s104
    %p108 = pneg %p102
    %p109 = scmp.eq.s32.totalorder %s9, 1
    %p110 = por %p108, %p109
    %p111 = scmp.ne.s32.totalorder %s103, %s106
    %p112 = scmp.eq.s32.totalorder %s9, 0
    %p113 = por %p111, %p112
    %p114 = scmp.ne.s32.totalorder %s103, %s106
    %p115 = scmp.eq.s32.totalorder %s14, 1
    %p116 = por %p114, %p115
    %p117 = scmp.ne.s32.totalorder %s106, %s107
    %p118 = scmp.eq.s32.totalorder %s14, 0
    %p119 = por %p117, %p118
    %p120 = scmp.ne.s32.totalorder %s106, %s107
    %p121 = scmp.eq.s32.totalorder %s15, 1
    %p122 = por %p120, %p121
    %p124 = scmp.ne.s32.totalorder %s107, %s123
    %p125 = scmp.eq.s32.totalorder %s15, 0
    %p126 = por %p124, %p125
    %p127 = scmp.le.s32.totalorder 1, %s9
    %p128 = scmp.lt.s32.totalorder %s9, 3
    %p129 = pnand %p127, %p128
    %p130 = pneg %p129
    // Predicated region
    $region9: #{conv_bn_silu.1} parent=5 // pred_check
      _
    $region10: #{conv_bn_silu.1} parent=5 // pred_check_branch
      %132 = sbr.rel (%p129) target = $region12
    $region11: #{conv_bn_silu.1} parent=5 // pred_region
      %s133 = ssub.s32 %s9, 1
      // Predicated region
      $region13: #{conv_bn_silu.1} parent=11 // pred_check
        %p134 = pneg %p70
      $region14: #{conv_bn_silu.1} parent=11 // pred_check_branch
        %136 = sbr.rel (%p134) target = $region16
      $region15: #{conv_bn_silu.1} parent=11 // pred_region
        _
      $region16: #{conv_bn_silu.1} parent=11 // pred_fallthru
        _
      // Predicated region
      $region17: #{conv_bn_silu.1} parent=11 // pred_check
        %p137 = pneg %p91
      $region18: #{conv_bn_silu.1} parent=11 // pred_check_branch
        %139 = sbr.rel (%p137) target = $region20
      $region19: #{conv_bn_silu.1} parent=11 // pred_region
        _
      $region20: #{conv_bn_silu.1} parent=11 // pred_fallthru
        _
    $region12: #{conv_bn_silu.1} parent=5 // pred_fallthru
      _
    %p140 = scmp.lt.s32.totalorder %s9, 2
    // Predicated region
    $region21: #{conv_bn_silu.1} parent=5 // pred_check
      %p141 = pneg %p140
    $region22: #{conv_bn_silu.1} parent=5 // pred_check_branch
      %143 = sbr.rel (%p141) target = $region24
    $region23: #{conv_bn_silu.1} parent=5 // pred_region
      // Predicated region
      $region25: #{conv_bn_silu.1} parent=23 // pred_check
        %p144 = pneg %p43
      $region26: #{conv_bn_silu.1} parent=23 // pred_check_branch
        %146 = sbr.rel (%p144) target = $region28
      $region27: #{conv_bn_silu.1} parent=23 // pred_region
        %s147 = smul.u32 32, %s17
        %p148 = scmp.lt.s32.totalorder %s16, 1
        %s149 = scalar_select %p148, %s16, 1
        %p150 = scmp.lt.s32.totalorder %s147, 31
        %s151 = scalar_select %p150, %s147, 31
        %s152 = smul.addr %s149, 32
        %s153 = sadd.s32 %s151, %s152
        %s154 = smul.addr %s153, 4
        %s155 = scalar_lea.vmem %s0, %s154
        %s156 = smul.u32 32, %s17
      $region28: #{conv_bn_silu.1} parent=23 // pred_fallthru
        _
    $region24: #{conv_bn_silu.1} parent=5 // pred_fallthru
      _
    %p157 = scmp.le.s32.totalorder 1, %s9
    %p158 = scmp.lt.s32.totalorder %s9, 3
    %p159 = pnand %p157, %p158
    %p160 = pneg %p159
    // Predicated region
    $region29: #{conv_bn_silu.1} parent=5 // pred_check
      _
    $region30: #{conv_bn_silu.1} parent=5 // pred_check_branch
      %162 = sbr.rel (%p159) target = $region32
    $region31: #{conv_bn_silu.1} parent=5 // pred_region
      %s163 = ssub.s32 %s9, 1
      %s164 = smul.u32 32, %s19
      %p165 = scmp.lt.s32.totalorder %s18, 1
      %s166 = scalar_select %p165, %s18, 1
      %p167 = scmp.lt.s32.totalorder %s164, 31
      %s168 = scalar_select %p167, %s164, 31
      %s169 = smul.addr %s166, 32
      %s170 = sadd.s32 %s168, %s169
      %s171 = smul.addr %s170, 4
      %s172 = scalar_lea.vmem %s0, %s171
      %p173 = pneg %p49
      %p174 = pneg %p46
      %p175 = pneg %p70
      %p176 = pneg %p67
      %p177 = pneg %p91
      %p178 = pneg %p88
      %p179 = pneg %p119
      %p180 = pneg %p116
      %s181 = smul.u32 32, %s19
      %p182 = scmp.lt.s32.totalorder %s18, 1
      %s183 = scalar_select %p182, %s18, 1
      %p184 = scmp.lt.s32.totalorder %s181, 31
      %s185 = scalar_select %p184, %s181, 31
      %s186 = smul.addr %s183, 32
      %s187 = sadd.s32 %s185, %s186
      %s188 = smul.addr %s187, 8
      %s189 = scalar_lea.vmem %s3, %s188
      %s190 = smul.u32 32, %s19
      %p191 = scmp.lt.s32.totalorder %s18, 1
      %s192 = scalar_select %p191, %s18, 1
      %p193 = scmp.lt.s32.totalorder %s190, 31
      %s194 = scalar_select %p193, %s190, 31
      %s195 = smul.addr %s192, 32
      %s196 = sadd.s32 %s194, %s195
      %s197 = smul.addr %s196, 4
      %s198 = scalar_lea.vmem %s0, %s197
      %s199 = smul.u32 32, %s19
      %s200 = smul.u32 32, %s19
      %p201 = scmp.lt.s32.totalorder %s18, 1
      %s202 = scalar_select %p201, %s18, 1
      %p203 = scmp.lt.s32.totalorder %s200, 31
      %s204 = scalar_select %p203, %s200, 31
      %s205 = smul.addr %s202, 32
      %s206 = sadd.s32 %s204, %s205
      %s207 = smul.addr %s206, 8
      %s208 = scalar_lea.vmem %s3, %s207
      %s209 = smul.u32 32, %s19
      %v211 = vld [vmem:[%s198] sm:$0xf]
      %v212 = vld [vmem:[%s198 + $0x4] sm:$0xf]
      %v213 = vld [vmem:[%s198 + $0x8] sm:$0xf]
      %v214 = vld [vmem:[%s198 + $0xc] sm:$0xf]
      %v215 = vld [vmem:[%s198 + $0x10] sm:$0xf]
      %v216 = vld [vmem:[%s198 + $0x14] sm:$0xf]
      %v217 = vld [vmem:[%s198 + $0x18] sm:$0xf]
      %v218 = vld [vmem:[%s198 + $0x1c] sm:$0xf]
      %v219 = vld [vmem:[%s198 + $0x20] sm:$0xf]
      %v220 = vld [vmem:[%s198 + $0x24] sm:$0xf]
      %v221 = vld [vmem:[%s198 + $0x28] sm:$0xf]
      %v222 = vld [vmem:[%s198 + $0x2c] sm:$0xf]
      %v223 = vld [vmem:[%s198 + $0x30] sm:$0xf]
      %v224 = vld [vmem:[%s198 + $0x34] sm:$0xf]
      %v225 = vld [vmem:[%s198 + $0x38] sm:$0xf]
      %v226 = vld [vmem:[%s198 + $0x3c] sm:$0xf]
      %v227 = vld [vmem:[%s198 + $0x40] sm:$0xf]
      %v228 = vld [vmem:[%s198 + $0x44] sm:$0xf]
      %v229 = vld [vmem:[%s198 + $0x48] sm:$0xf]
      %v230 = vld [vmem:[%s198 + $0x4c] sm:$0xf]
      %v231 = vld [vmem:[%s198 + $0x50] sm:$0xf]
      %v232 = vld [vmem:[%s198 + $0x54] sm:$0xf]
      %v233 = vld [vmem:[%s198 + $0x58] sm:$0xf]
      %v234 = vld [vmem:[%s198 + $0x5c] sm:$0xf]
      %v235 = vld [vmem:[%s198 + $0x60] sm:$0xf]
      %v236 = vld [vmem:[%s198 + $0x64] sm:$0xf]
      %v237 = vld [vmem:[%s198 + $0x68] sm:$0xf]
      %v238 = vld [vmem:[%s198 + $0x6c] sm:$0xf]
      %v239 = vld [vmem:[%s198 + $0x70] sm:$0xf]
      %v240 = vld [vmem:[%s198 + $0x74] sm:$0xf]
      %v241 = vld [vmem:[%s198 + $0x78] sm:$0xf]
      %v242 = vld [vmem:[%s198 + $0x7c] sm:$0xf]
      %v243 = vld [vmem:[%s1] sm:$0xf]
      %v244 = vld [vmem:[%s2] sm:$0x1]
      %v246 = vperm.slane %v244, 0
      %v280 = vunpack.c.l.b16 %v211
      %v281 = vunpack.c.l.b16 %v212
      %v282 = vunpack.c.l.b16 %v213
      %v283 = vunpack.c.l.b16 %v214
      %v284 = vunpack.c.l.b16 %v215
      %v285 = vunpack.c.l.b16 %v216
      %v286 = vunpack.c.l.b16 %v217
      %v287 = vunpack.c.l.b16 %v218
      %v288 = vunpack.c.l.b16 %v219
      %v289 = vunpack.c.l.b16 %v220
      %v290 = vunpack.c.l.b16 %v221
      %v291 = vunpack.c.l.b16 %v222
      %v292 = vunpack.c.l.b16 %v223
      %v293 = vunpack.c.l.b16 %v224
      %v294 = vunpack.c.l.b16 %v225
      %v295 = vunpack.c.l.b16 %v226
      %v296 = vunpack.c.l.b16 %v227
      %v297 = vunpack.c.l.b16 %v228
      %v298 = vunpack.c.l.b16 %v229
      %v299 = vunpack.c.l.b16 %v230
      %v300 = vunpack.c.l.b16 %v231
      %v301 = vunpack.c.l.b16 %v232
      %v302 = vunpack.c.l.b16 %v233
      %v303 = vunpack.c.l.b16 %v234
      %v304 = vunpack.c.l.b16 %v235
      %v305 = vunpack.c.l.b16 %v236
      %v306 = vunpack.c.l.b16 %v237
      %v307 = vunpack.c.l.b16 %v238
      %v308 = vunpack.c.l.b16 %v239
      %v309 = vunpack.c.l.b16 %v240
      %v310 = vunpack.c.l.b16 %v241
      %v311 = vunpack.c.l.b16 %v242
      %v312 = vpack.c.b16 %v281, %v280
      %v313 = vpack.c.b16 %v283, %v282
      %v314 = vpack.c.b16 %v285, %v284
      %v315 = vpack.c.b16 %v287, %v286
      %v316 = vpack.c.b16 %v289, %v288
      %v317 = vpack.c.b16 %v291, %v290
      %v318 = vpack.c.b16 %v293, %v292
      %v319 = vpack.c.b16 %v295, %v294
      %v320 = vpack.c.b16 %v297, %v296
      %v321 = vpack.c.b16 %v299, %v298
      %v322 = vpack.c.b16 %v301, %v300
      %v323 = vpack.c.b16 %v303, %v302
      %v324 = vpack.c.b16 %v305, %v304
      %v325 = vpack.c.b16 %v307, %v306
      %v326 = vpack.c.b16 %v309, %v308
      %v327 = vpack.c.b16 %v311, %v310
      %vm328 = vcmask 64512
      %v330 = vsel %vm328, %v312, 0
      %v333 = vsel %vm328, %v313, 0
      %v336 = vsel %vm328, %v314, 0
      %v339 = vsel %vm328, %v315, 0
      %v342 = vsel %vm328, %v316, 0
      %v345 = vsel %vm328, %v317, 0
      %v348 = vsel %vm328, %v318, 0
      %v351 = vsel %vm328, %v319, 0
      %v354 = vsel %vm328, %v320, 0
      %v357 = vsel %vm328, %v321, 0
      %v360 = vsel %vm328, %v322, 0
      %v363 = vsel %vm328, %v323, 0
      %v366 = vsel %vm328, %v324, 0
      %v369 = vsel %vm328, %v325, 0
      %v372 = vsel %vm328, %v326, 0
      %v375 = vsel %vm328, %v327, 0
      %vm377 = vcmask 1043456
      %v379 = vsel %vm377, %v243, 0
      %381 = vmatpush.bf16.msra.mxu0 0
      %382 = vmatpush.bf16.msra.mxu0 0
      %383 = vmatpush.bf16.msra.mxu0 0
      %384 = vmatpush.bf16.msra.mxu0 0
      %385 = vmatpush.bf16.msra.mxu0 0
      %386 = vmatpush.bf16.msra.mxu0 0
      %387 = vmatpush.bf16.msra.mxu0 0
      %388 = vmatpush.bf16.msra.mxu0 %v379
      %389 = vmatmul.bf16.gmra.mxu0 %v330
      %v390 = vpop.f32.mrf.mxu0
      %v391 = vadd.f32 %v246, %v390
      %v392 = vpop.f32.mrf.mxu0
      %v393 = vadd.f32 %v246, %v392
      %394 = vmatmul.bf16.gmra.mxu0 %v333
      %v395 = vpop.f32.mrf.mxu0
      %v396 = vadd.f32 %v246, %v395
      %v397 = vpop.f32.mrf.mxu0
      %v398 = vadd.f32 %v246, %v397
      %399 = vmatmul.bf16.gmra.mxu0 %v336
      %v400 = vpop.f32.mrf.mxu0
      %v401 = vadd.f32 %v246, %v400
      %v402 = vpop.f32.mrf.mxu0
      %v403 = vadd.f32 %v246, %v402
      %404 = vmatmul.bf16.gmra.mxu0 %v339
      %v405 = vpop.f32.mrf.mxu0
      %v406 = vadd.f32 %v246, %v405
      %v407 = vpop.f32.mrf.mxu0
      %v408 = vadd.f32 %v246, %v407
      %409 = vmatmul.bf16.gmra.mxu0 %v342
      %v410 = vpop.f32.mrf.mxu0
      %v411 = vadd.f32 %v246, %v410
      %v412 = vpop.f32.mrf.mxu0
      %v413 = vadd.f32 %v246, %v412
      %414 = vmatmul.bf16.gmra.mxu0 %v345
      %v415 = vpop.f32.mrf.mxu0
      %v416 = vadd.f32 %v246, %v415
      %v417 = vpop.f32.mrf.mxu0
      %v418 = vadd.f32 %v246, %v417
      %419 = vmatmul.bf16.gmra.mxu0 %v348
      %v420 = vpop.f32.mrf.mxu0
      %v421 = vadd.f32 %v246, %v420
      %v422 = vpop.f32.mrf.mxu0
      %v423 = vadd.f32 %v246, %v422
      %424 = vmatmul.bf16.gmra.mxu0 %v351
      %v425 = vpop.f32.mrf.mxu0
      %v426 = vadd.f32 %v246, %v425
      %v427 = vpop.f32.mrf.mxu0
      %v428 = vadd.f32 %v246, %v427
      %429 = vmatmul.bf16.gmra.mxu0 %v354
      %v430 = vpop.f32.mrf.mxu0
      %v431 = vadd.f32 %v246, %v430
      %v432 = vpop.f32.mrf.mxu0
      %v433 = vadd.f32 %v246, %v432
      %434 = vmatmul.bf16.gmra.mxu0 %v357
      %v435 = vpop.f32.mrf.mxu0
      %v436 = vadd.f32 %v246, %v435
      %v437 = vpop.f32.mrf.mxu0
      %v438 = vadd.f32 %v246, %v437
      %439 = vmatmul.bf16.gmra.mxu0 %v360
      %v440 = vpop.f32.mrf.mxu0
      %v441 = vadd.f32 %v246, %v440
      %v442 = vpop.f32.mrf.mxu0
      %v443 = vadd.f32 %v246, %v442
      %444 = vmatmul.bf16.gmra.mxu0 %v363
      %v445 = vpop.f32.mrf.mxu0
      %v446 = vadd.f32 %v246, %v445
      %v447 = vpop.f32.mrf.mxu0
      %v448 = vadd.f32 %v246, %v447
      %449 = vmatmul.bf16.gmra.mxu0 %v366
      %v450 = vpop.f32.mrf.mxu0
      %v451 = vadd.f32 %v246, %v450
      %v452 = vpop.f32.mrf.mxu0
      %v453 = vadd.f32 %v246, %v452
      %454 = vmatmul.bf16.gmra.mxu0 %v369
      %v455 = vpop.f32.mrf.mxu0
      %v456 = vadd.f32 %v246, %v455
      %v457 = vpop.f32.mrf.mxu0
      %v458 = vadd.f32 %v246, %v457
      %459 = vmatmul.bf16.gmra.mxu0 %v372
      %v460 = vpop.f32.mrf.mxu0
      %v461 = vadd.f32 %v246, %v460
      %v462 = vpop.f32.mrf.mxu0
      %v463 = vadd.f32 %v246, %v462
      %464 = vmatmul.bf16.gmra.mxu0 %v375
      %v465 = vpop.f32.mrf.mxu0
      %v466 = vadd.f32 %v246, %v465
      %v467 = vpop.f32.mrf.mxu0
      %v468 = vadd.f32 %v246, %v467
      %469 = vdwg.mxu0
      %v470 = vsub.f32 0.0, %v391
      %v471 = vsub.f32 0.0, %v393
      %v472 = vsub.f32 0.0, %v396
      %v473 = vsub.f32 0.0, %v398
      %v474 = vsub.f32 0.0, %v401
      %v475 = vsub.f32 0.0, %v403
      %v476 = vsub.f32 0.0, %v406
      %v477 = vsub.f32 0.0, %v408
      %v478 = vsub.f32 0.0, %v411
      %v479 = vsub.f32 0.0, %v413
      %v480 = vsub.f32 0.0, %v416
      %v481 = vsub.f32 0.0, %v418
      %v482 = vsub.f32 0.0, %v421
      %v483 = vsub.f32 0.0, %v423
      %v484 = vsub.f32 0.0, %v426
      %v485 = vsub.f32 0.0, %v428
      %v486 = vsub.f32 0.0, %v431
      %v487 = vsub.f32 0.0, %v433
      %v488 = vsub.f32 0.0, %v436
      %v489 = vsub.f32 0.0, %v438
      %v490 = vsub.f32 0.0, %v441
      %v491 = vsub.f32 0.0, %v443
      %v492 = vsub.f32 0.0, %v446
      %v493 = vsub.f32 0.0, %v448
      %v494 = vsub.f32 0.0, %v451
      %v495 = vsub.f32 0.0, %v453
      %v496 = vsub.f32 0.0, %v456
      %v497 = vsub.f32 0.0, %v458
      %v498 = vsub.f32 0.0, %v461
      %v499 = vsub.f32 0.0, %v463
      %v500 = vsub.f32 0.0, %v466
      %v501 = vsub.f32 0.0, %v468
      %v502 = vmul.f32 %v470, 1.442695
      %v503 = vpow.pop %v502
      %v504 = vmul.f32 %v471, 1.442695
      %v505 = vpow.pop %v504
      %v506 = vmul.f32 %v472, 1.442695
      %v507 = vpow.pop %v506
      %v508 = vmul.f32 %v473, 1.442695
      %v509 = vpow.pop %v508
      %v510 = vmul.f32 %v474, 1.442695
      %v511 = vpow.pop %v510
      %v512 = vmul.f32 %v475, 1.442695
      %v513 = vpow.pop %v512
      %v514 = vmul.f32 %v476, 1.442695
      %v515 = vpow.pop %v514
      %v516 = vmul.f32 %v477, 1.442695
      %v517 = vpow.pop %v516
      %v518 = vmul.f32 %v478, 1.442695
      %v519 = vpow.pop %v518
      %v520 = vmul.f32 %v479, 1.442695
      %v521 = vpow.pop %v520
      %v522 = vmul.f32 %v480, 1.442695
      %v523 = vpow.pop %v522
      %v524 = vmul.f32 %v481, 1.442695
      %v525 = vpow.pop %v524
      %v526 = vmul.f32 %v482, 1.442695
      %v527 = vpow.pop %v526
      %v528 = vmul.f32 %v483, 1.442695
      %v529 = vpow.pop %v528
      %v530 = vmul.f32 %v484, 1.442695
      %v531 = vpow.pop %v530
      %v532 = vmul.f32 %v485, 1.442695
      %v533 = vpow.pop %v532
      %v534 = vmul.f32 %v486, 1.442695
      %v535 = vpow.pop %v534
      %v536 = vmul.f32 %v487, 1.442695
      %v537 = vpow.pop %v536
      %v538 = vmul.f32 %v488, 1.442695
      %v539 = vpow.pop %v538
      %v540 = vmul.f32 %v489, 1.442695
      %v541 = vpow.pop %v540
      %v542 = vmul.f32 %v490, 1.442695
      %v543 = vpow.pop %v542
      %v544 = vmul.f32 %v491, 1.442695
      %v545 = vpow.pop %v544
      %v546 = vmul.f32 %v492, 1.442695
      %v547 = vpow.pop %v546
      %v548 = vmul.f32 %v493, 1.442695
      %v549 = vpow.pop %v548
      %v550 = vmul.f32 %v494, 1.442695
      %v551 = vpow.pop %v550
      %v552 = vmul.f32 %v495, 1.442695
      %v553 = vpow.pop %v552
      %v554 = vmul.f32 %v496, 1.442695
      %v555 = vpow.pop %v554
      %v556 = vmul.f32 %v497, 1.442695
      %v557 = vpow.pop %v556
      %v558 = vmul.f32 %v498, 1.442695
      %v559 = vpow.pop %v558
      %v560 = vmul.f32 %v499, 1.442695
      %v561 = vpow.pop %v560
      %v562 = vmul.f32 %v500, 1.442695
      %v563 = vpow.pop %v562
      %v564 = vmul.f32 %v501, 1.442695
      %v565 = vpow.pop %v564
      %v566 = vadd.f32 %v503, 1.0
      %v567 = vadd.f32 %v505, 1.0
      %v568 = vadd.f32 %v507, 1.0
      %v569 = vadd.f32 %v509, 1.0
      %v570 = vadd.f32 %v511, 1.0
      %v571 = vadd.f32 %v513, 1.0
      %v572 = vadd.f32 %v515, 1.0
      %v573 = vadd.f32 %v517, 1.0
      %v574 = vadd.f32 %v519, 1.0
      %v575 = vadd.f32 %v521, 1.0
      %v576 = vadd.f32 %v523, 1.0
      %v577 = vadd.f32 %v525, 1.0
      %v578 = vadd.f32 %v527, 1.0
      %v579 = vadd.f32 %v529, 1.0
      %v580 = vadd.f32 %v531, 1.0
      %v581 = vadd.f32 %v533, 1.0
      %v582 = vadd.f32 %v535, 1.0
      %v583 = vadd.f32 %v537, 1.0
      %v584 = vadd.f32 %v539, 1.0
      %v585 = vadd.f32 %v541, 1.0
      %v586 = vadd.f32 %v543, 1.0
      %v587 = vadd.f32 %v545, 1.0
      %v588 = vadd.f32 %v547, 1.0
      %v589 = vadd.f32 %v549, 1.0
      %v590 = vadd.f32 %v551, 1.0
      %v591 = vadd.f32 %v553, 1.0
      %v592 = vadd.f32 %v555, 1.0
      %v593 = vadd.f32 %v557, 1.0
      %v594 = vadd.f32 %v559, 1.0
      %v595 = vadd.f32 %v561, 1.0
      %v596 = vadd.f32 %v563, 1.0
      %v597 = vadd.f32 %v565, 1.0
      %v598 = vrcp.pop %v566
      %v599 = vmul.f32 %v566, %v598
      %v600 = vsub.f32 1.0, %v599
      %v601 = vmul.f32 %v598, %v600
      %v602 = vadd.f32 %v598, %v601
      %vm603 = vweird.f32 %v566
      %vm604 = vweird.f32 %v598
      %vm605 = vmor %vm603, %vm604
      %v606 = vsel %vm605, %v598, %v602
      %v607 = vand.u32 2147483647, %v566
      %vm608 = vcmp.eq.f32.partialorder %v607, 8.507059e+37
      %v609 = vand.u32 %v566, 2147483648
      %v610 = vor.u32 1.1754944e-38, %v609
      %v611 = vsel %vm608, %v610, %v606
      %v612 = vrcp.pop %v567
      %v613 = vmul.f32 %v567, %v612
      %v614 = vsub.f32 1.0, %v613
      %v615 = vmul.f32 %v612, %v614
      %v616 = vadd.f32 %v612, %v615
      %vm617 = vweird.f32 %v567
      %vm618 = vweird.f32 %v612
      %vm619 = vmor %vm617, %vm618
      %v620 = vsel %vm619, %v612, %v616
      %v621 = vand.u32 2147483647, %v567
      %vm622 = vcmp.eq.f32.partialorder %v621, 8.507059e+37
      %v623 = vand.u32 %v567, 2147483648
      %v624 = vor.u32 1.1754944e-38, %v623
      %v625 = vsel %vm622, %v624, %v620
      %v626 = vrcp.pop %v568
      %v627 = vmul.f32 %v568, %v626
      %v628 = vsub.f32 1.0, %v627
      %v629 = vmul.f32 %v626, %v628
      %v630 = vadd.f32 %v626, %v629
      %vm631 = vweird.f32 %v568
      %vm632 = vweird.f32 %v626
      %vm633 = vmor %vm631, %vm632
      %v634 = vsel %vm633, %v626, %v630
      %v635 = vand.u32 2147483647, %v568
      %vm636 = vcmp.eq.f32.partialorder %v635, 8.507059e+37
      %v637 = vand.u32 %v568, 2147483648
      %v638 = vor.u32 1.1754944e-38, %v637
      %v639 = vsel %vm636, %v638, %v634
      %v640 = vrcp.pop %v569
      %v641 = vmul.f32 %v569, %v640
      %v642 = vsub.f32 1.0, %v641
      %v643 = vmul.f32 %v640, %v642
      %v644 = vadd.f32 %v640, %v643
      %vm645 = vweird.f32 %v569
      %vm646 = vweird.f32 %v640
      %vm647 = vmor %vm645, %vm646
      %v648 = vsel %vm647, %v640, %v644
      %v649 = vand.u32 2147483647, %v569
      %vm650 = vcmp.eq.f32.partialorder %v649, 8.507059e+37
      %v651 = vand.u32 %v569, 2147483648
      %v652 = vor.u32 1.1754944e-38, %v651
      %v653 = vsel %vm650, %v652, %v648
      %v654 = vrcp.pop %v570
      %v655 = vmul.f32 %v570, %v654
      %v656 = vsub.f32 1.0, %v655
      %v657 = vmul.f32 %v654, %v656
      %v658 = vadd.f32 %v654, %v657
      %vm659 = vweird.f32 %v570
      %vm660 = vweird.f32 %v654
      %vm661 = vmor %vm659, %vm660
      %v662 = vsel %vm661, %v654, %v658
      %v663 = vand.u32 2147483647, %v570
      %vm664 = vcmp.eq.f32.partialorder %v663, 8.507059e+37
      %v665 = vand.u32 %v570, 2147483648
      %v666 = vor.u32 1.1754944e-38, %v665
      %v667 = vsel %vm664, %v666, %v662
      %v668 = vrcp.pop %v571
      %v669 = vmul.f32 %v571, %v668
      %v670 = vsub.f32 1.0, %v669
      %v671 = vmul.f32 %v668, %v670
      %v672 = vadd.f32 %v668, %v671
      %vm673 = vweird.f32 %v571
      %vm674 = vweird.f32 %v668
      %vm675 = vmor %vm673, %vm674
      %v676 = vsel %vm675, %v668, %v672
      %v677 = vand.u32 2147483647, %v571
      %vm678 = vcmp.eq.f32.partialorder %v677, 8.507059e+37
      %v679 = vand.u32 %v571, 2147483648
      %v680 = vor.u32 1.1754944e-38, %v679
      %v681 = vsel %vm678, %v680, %v676
      %v682 = vrcp.pop %v572
      %v683 = vmul.f32 %v572, %v682
      %v684 = vsub.f32 1.0, %v683
      %v685 = vmul.f32 %v682, %v684
      %v686 = vadd.f32 %v682, %v685
      %vm687 = vweird.f32 %v572
      %vm688 = vweird.f32 %v682
      %vm689 = vmor %vm687, %vm688
      %v690 = vsel %vm689, %v682, %v686
      %v691 = vand.u32 2147483647, %v572
      %vm692 = vcmp.eq.f32.partialorder %v691, 8.507059e+37
      %v693 = vand.u32 %v572, 2147483648
      %v694 = vor.u32 1.1754944e-38, %v693
      %v695 = vsel %vm692, %v694, %v690
      %v696 = vrcp.pop %v573
      %v697 = vmul.f32 %v573, %v696
      %v698 = vsub.f32 1.0, %v697
      %v699 = vmul.f32 %v696, %v698
      %v700 = vadd.f32 %v696, %v699
      %vm701 = vweird.f32 %v573
      %vm702 = vweird.f32 %v696
      %vm703 = vmor %vm701, %vm702
      %v704 = vsel %vm703, %v696, %v700
      %v705 = vand.u32 2147483647, %v573
      %vm706 = vcmp.eq.f32.partialorder %v705, 8.507059e+37
      %v707 = vand.u32 %v573, 2147483648
      %v708 = vor.u32 1.1754944e-38, %v707
      %v709 = vsel %vm706, %v708, %v704
      %v710 = vrcp.pop %v574
      %v711 = vmul.f32 %v574, %v710
      %v712 = vsub.f32 1.0, %v711
      %v713 = vmul.f32 %v710, %v712
      %v714 = vadd.f32 %v710, %v713
      %vm715 = vweird.f32 %v574
      %vm716 = vweird.f32 %v710
      %vm717 = vmor %vm715, %vm716
      %v718 = vsel %vm717, %v710, %v714
      %v719 = vand.u32 2147483647, %v574
      %vm720 = vcmp.eq.f32.partialorder %v719, 8.507059e+37
      %v721 = vand.u32 %v574, 2147483648
      %v722 = vor.u32 1.1754944e-38, %v721
      %v723 = vsel %vm720, %v722, %v718
      %v724 = vrcp.pop %v575
      %v725 = vmul.f32 %v575, %v724
      %v726 = vsub.f32 1.0, %v725
      %v727 = vmul.f32 %v724, %v726
      %v728 = vadd.f32 %v724, %v727
      %vm729 = vweird.f32 %v575
      %vm730 = vweird.f32 %v724
      %vm731 = vmor %vm729, %vm730
      %v732 = vsel %vm731, %v724, %v728
      %v733 = vand.u32 2147483647, %v575
      %vm734 = vcmp.eq.f32.partialorder %v733, 8.507059e+37
      %v735 = vand.u32 %v575, 2147483648
      %v736 = vor.u32 1.1754944e-38, %v735
      %v737 = vsel %vm734, %v736, %v732
      %v738 = vrcp.pop %v576
      %v739 = vmul.f32 %v576, %v738
      %v740 = vsub.f32 1.0, %v739
      %v741 = vmul.f32 %v738, %v740
      %v742 = vadd.f32 %v738, %v741
      %vm743 = vweird.f32 %v576
      %vm744 = vweird.f32 %v738
      %vm745 = vmor %vm743, %vm744
      %v746 = vsel %vm745, %v738, %v742
      %v747 = vand.u32 2147483647, %v576
      %vm748 = vcmp.eq.f32.partialorder %v747, 8.507059e+37
      %v749 = vand.u32 %v576, 2147483648
      %v750 = vor.u32 1.1754944e-38, %v749
      %v751 = vsel %vm748, %v750, %v746
      %v752 = vrcp.pop %v577
      %v753 = vmul.f32 %v577, %v752
      %v754 = vsub.f32 1.0, %v753
      %v755 = vmul.f32 %v752, %v754
      %v756 = vadd.f32 %v752, %v755
      %vm757 = vweird.f32 %v577
      %vm758 = vweird.f32 %v752
      %vm759 = vmor %vm757, %vm758
      %v760 = vsel %vm759, %v752, %v756
      %v761 = vand.u32 2147483647, %v577
      %vm762 = vcmp.eq.f32.partialorder %v761, 8.507059e+37
      %v763 = vand.u32 %v577, 2147483648
      %v764 = vor.u32 1.1754944e-38, %v763
      %v765 = vsel %vm762, %v764, %v760
      %v766 = vrcp.pop %v578
      %v767 = vmul.f32 %v578, %v766
      %v768 = vsub.f32 1.0, %v767
      %v769 = vmul.f32 %v766, %v768
      %v770 = vadd.f32 %v766, %v769
      %vm771 = vweird.f32 %v578
      %vm772 = vweird.f32 %v766
      %vm773 = vmor %vm771, %vm772
      %v774 = vsel %vm773, %v766, %v770
      %v775 = vand.u32 2147483647, %v578
      %vm776 = vcmp.eq.f32.partialorder %v775, 8.507059e+37
      %v777 = vand.u32 %v578, 2147483648
      %v778 = vor.u32 1.1754944e-38, %v777
      %v779 = vsel %vm776, %v778, %v774
      %v780 = vrcp.pop %v579
      %v781 = vmul.f32 %v579, %v780
      %v782 = vsub.f32 1.0, %v781
      %v783 = vmul.f32 %v780, %v782
      %v784 = vadd.f32 %v780, %v783
      %vm785 = vweird.f32 %v579
      %vm786 = vweird.f32 %v780
      %vm787 = vmor %vm785, %vm786
      %v788 = vsel %vm787, %v780, %v784
      %v789 = vand.u32 2147483647, %v579
      %vm790 = vcmp.eq.f32.partialorder %v789, 8.507059e+37
      %v791 = vand.u32 %v579, 2147483648
      %v792 = vor.u32 1.1754944e-38, %v791
      %v793 = vsel %vm790, %v792, %v788
      %v794 = vrcp.pop %v580
      %v795 = vmul.f32 %v580, %v794
      %v796 = vsub.f32 1.0, %v795
      %v797 = vmul.f32 %v794, %v796
      %v798 = vadd.f32 %v794, %v797
      %vm799 = vweird.f32 %v580
      %vm800 = vweird.f32 %v794
      %vm801 = vmor %vm799, %vm800
      %v802 = vsel %vm801, %v794, %v798
      %v803 = vand.u32 2147483647, %v580
      %vm804 = vcmp.eq.f32.partialorder %v803, 8.507059e+37
      %v805 = vand.u32 %v580, 2147483648
      %v806 = vor.u32 1.1754944e-38, %v805
      %v807 = vsel %vm804, %v806, %v802
      %v808 = vrcp.pop %v581
      %v809 = vmul.f32 %v581, %v808
      %v810 = vsub.f32 1.0, %v809
      %v811 = vmul.f32 %v808, %v810
      %v812 = vadd.f32 %v808, %v811
      %vm813 = vweird.f32 %v581
      %vm814 = vweird.f32 %v808
      %vm815 = vmor %vm813, %vm814
      %v816 = vsel %vm815, %v808, %v812
      %v817 = vand.u32 2147483647, %v581
      %vm818 = vcmp.eq.f32.partialorder %v817, 8.507059e+37
      %v819 = vand.u32 %v581, 2147483648
      %v820 = vor.u32 1.1754944e-38, %v819
      %v821 = vsel %vm818, %v820, %v816
      %v822 = vrcp.pop %v582
      %v823 = vmul.f32 %v582, %v822
      %v824 = vsub.f32 1.0, %v823
      %v825 = vmul.f32 %v822, %v824
      %v826 = vadd.f32 %v822, %v825
      %vm827 = vweird.f32 %v582
      %vm828 = vweird.f32 %v822
      %vm829 = vmor %vm827, %vm828
      %v830 = vsel %vm829, %v822, %v826
      %v831 = vand.u32 2147483647, %v582
      %vm832 = vcmp.eq.f32.partialorder %v831, 8.507059e+37
      %v833 = vand.u32 %v582, 2147483648
      %v834 = vor.u32 1.1754944e-38, %v833
      %v835 = vsel %vm832, %v834, %v830
      %v836 = vrcp.pop %v583
      %v837 = vmul.f32 %v583, %v836
      %v838 = vsub.f32 1.0, %v837
      %v839 = vmul.f32 %v836, %v838
      %v840 = vadd.f32 %v836, %v839
      %vm841 = vweird.f32 %v583
      %vm842 = vweird.f32 %v836
      %vm843 = vmor %vm841, %vm842
      %v844 = vsel %vm843, %v836, %v840
      %v845 = vand.u32 2147483647, %v583
      %vm846 = vcmp.eq.f32.partialorder %v845, 8.507059e+37
      %v847 = vand.u32 %v583, 2147483648
      %v848 = vor.u32 1.1754944e-38, %v847
      %v849 = vsel %vm846, %v848, %v844
      %v850 = vrcp.pop %v584
      %v851 = vmul.f32 %v584, %v850
      %v852 = vsub.f32 1.0, %v851
      %v853 = vmul.f32 %v850, %v852
      %v854 = vadd.f32 %v850, %v853
      %vm855 = vweird.f32 %v584
      %vm856 = vweird.f32 %v850
      %vm857 = vmor %vm855, %vm856
      %v858 = vsel %vm857, %v850, %v854
      %v859 = vand.u32 2147483647, %v584
      %vm860 = vcmp.eq.f32.partialorder %v859, 8.507059e+37
      %v861 = vand.u32 %v584, 2147483648
      %v862 = vor.u32 1.1754944e-38, %v861
      %v863 = vsel %vm860, %v862, %v858
      %v864 = vrcp.pop %v585
      %v865 = vmul.f32 %v585, %v864
      %v866 = vsub.f32 1.0, %v865
      %v867 = vmul.f32 %v864, %v866
      %v868 = vadd.f32 %v864, %v867
      %vm869 = vweird.f32 %v585
      %vm870 = vweird.f32 %v864
      %vm871 = vmor %vm869, %vm870
      %v872 = vsel %vm871, %v864, %v868
      %v873 = vand.u32 2147483647, %v585
      %vm874 = vcmp.eq.f32.partialorder %v873, 8.507059e+37
      %v875 = vand.u32 %v585, 2147483648
      %v876 = vor.u32 1.1754944e-38, %v875
      %v877 = vsel %vm874, %v876, %v872
      %v878 = vrcp.pop %v586
      %v879 = vmul.f32 %v586, %v878
      %v880 = vsub.f32 1.0, %v879
      %v881 = vmul.f32 %v878, %v880
      %v882 = vadd.f32 %v878, %v881
      %vm883 = vweird.f32 %v586
      %vm884 = vweird.f32 %v878
      %vm885 = vmor %vm883, %vm884
      %v886 = vsel %vm885, %v878, %v882
      %v887 = vand.u32 2147483647, %v586
      %vm888 = vcmp.eq.f32.partialorder %v887, 8.507059e+37
      %v889 = vand.u32 %v586, 2147483648
      %v890 = vor.u32 1.1754944e-38, %v889
      %v891 = vsel %vm888, %v890, %v886
      %v892 = vrcp.pop %v587
      %v893 = vmul.f32 %v587, %v892
      %v894 = vsub.f32 1.0, %v893
      %v895 = vmul.f32 %v892, %v894
      %v896 = vadd.f32 %v892, %v895
      %vm897 = vweird.f32 %v587
      %vm898 = vweird.f32 %v892
      %vm899 = vmor %vm897, %vm898
      %v900 = vsel %vm899, %v892, %v896
      %v901 = vand.u32 2147483647, %v587
      %vm902 = vcmp.eq.f32.partialorder %v901, 8.507059e+37
      %v903 = vand.u32 %v587, 2147483648
      %v904 = vor.u32 1.1754944e-38, %v903
      %v905 = vsel %vm902, %v904, %v900
      %v906 = vrcp.pop %v588
      %v907 = vmul.f32 %v588, %v906
      %v908 = vsub.f32 1.0, %v907
      %v909 = vmul.f32 %v906, %v908
      %v910 = vadd.f32 %v906, %v909
      %vm911 = vweird.f32 %v588
      %vm912 = vweird.f32 %v906
      %vm913 = vmor %vm911, %vm912
      %v914 = vsel %vm913, %v906, %v910
      %v915 = vand.u32 2147483647, %v588
      %vm916 = vcmp.eq.f32.partialorder %v915, 8.507059e+37
      %v917 = vand.u32 %v588, 2147483648
      %v918 = vor.u32 1.1754944e-38, %v917
      %v919 = vsel %vm916, %v918, %v914
      %v920 = vrcp.pop %v589
      %v921 = vmul.f32 %v589, %v920
      %v922 = vsub.f32 1.0, %v921
      %v923 = vmul.f32 %v920, %v922
      %v924 = vadd.f32 %v920, %v923
      %vm925 = vweird.f32 %v589
      %vm926 = vweird.f32 %v920
      %vm927 = vmor %vm925, %vm926
      %v928 = vsel %vm927, %v920, %v924
      %v929 = vand.u32 2147483647, %v589
      %vm930 = vcmp.eq.f32.partialorder %v929, 8.507059e+37
      %v931 = vand.u32 %v589, 2147483648
      %v932 = vor.u32 1.1754944e-38, %v931
      %v933 = vsel %vm930, %v932, %v928
      %v934 = vrcp.pop %v590
      %v935 = vmul.f32 %v590, %v934
      %v936 = vsub.f32 1.0, %v935
      %v937 = vmul.f32 %v934, %v936
      %v938 = vadd.f32 %v934, %v937
      %vm939 = vweird.f32 %v590
      %vm940 = vweird.f32 %v934
      %vm941 = vmor %vm939, %vm940
      %v942 = vsel %vm941, %v934, %v938
      %v943 = vand.u32 2147483647, %v590
      %vm944 = vcmp.eq.f32.partialorder %v943, 8.507059e+37
      %v945 = vand.u32 %v590, 2147483648
      %v946 = vor.u32 1.1754944e-38, %v945
      %v947 = vsel %vm944, %v946, %v942
      %v948 = vrcp.pop %v591
      %v949 = vmul.f32 %v591, %v948
      %v950 = vsub.f32 1.0, %v949
      %v951 = vmul.f32 %v948, %v950
      %v952 = vadd.f32 %v948, %v951
      %vm953 = vweird.f32 %v591
      %vm954 = vweird.f32 %v948
      %vm955 = vmor %vm953, %vm954
      %v956 = vsel %vm955, %v948, %v952
      %v957 = vand.u32 2147483647, %v591
      %vm958 = vcmp.eq.f32.partialorder %v957, 8.507059e+37
      %v959 = vand.u32 %v591, 2147483648
      %v960 = vor.u32 1.1754944e-38, %v959
      %v961 = vsel %vm958, %v960, %v956
      %v962 = vrcp.pop %v592
      %v963 = vmul.f32 %v592, %v962
      %v964 = vsub.f32 1.0, %v963
      %v965 = vmul.f32 %v962, %v964
      %v966 = vadd.f32 %v962, %v965
      %vm967 = vweird.f32 %v592
      %vm968 = vweird.f32 %v962
      %vm969 = vmor %vm967, %vm968
      %v970 = vsel %vm969, %v962, %v966
      %v971 = vand.u32 2147483647, %v592
      %vm972 = vcmp.eq.f32.partialorder %v971, 8.507059e+37
      %v973 = vand.u32 %v592, 2147483648
      %v974 = vor.u32 1.1754944e-38, %v973
      %v975 = vsel %vm972, %v974, %v970
      %v976 = vrcp.pop %v593
      %v977 = vmul.f32 %v593, %v976
      %v978 = vsub.f32 1.0, %v977
      %v979 = vmul.f32 %v976, %v978
      %v980 = vadd.f32 %v976, %v979
      %vm981 = vweird.f32 %v593
      %vm982 = vweird.f32 %v976
      %vm983 = vmor %vm981, %vm982
      %v984 = vsel %vm983, %v976, %v980
      %v985 = vand.u32 2147483647, %v593
      %vm986 = vcmp.eq.f32.partialorder %v985, 8.507059e+37
      %v987 = vand.u32 %v593, 2147483648
      %v988 = vor.u32 1.1754944e-38, %v987
      %v989 = vsel %vm986, %v988, %v984
      %v990 = vrcp.pop %v594
      %v991 = vmul.f32 %v594, %v990
      %v992 = vsub.f32 1.0, %v991
      %v993 = vmul.f32 %v990, %v992
      %v994 = vadd.f32 %v990, %v993
      %vm995 = vweird.f32 %v594
      %vm996 = vweird.f32 %v990
      %vm997 = vmor %vm995, %vm996
      %v998 = vsel %vm997, %v990, %v994
      %v999 = vand.u32 2147483647, %v594
      %vm1000 = vcmp.eq.f32.partialorder %v999, 8.507059e+37
      %v1001 = vand.u32 %v594, 2147483648
      %v1002 = vor.u32 1.1754944e-38, %v1001
      %v1003 = vsel %vm1000, %v1002, %v998
      %v1004 = vrcp.pop %v595
      %v1005 = vmul.f32 %v595, %v1004
      %v1006 = vsub.f32 1.0, %v1005
      %v1007 = vmul.f32 %v1004, %v1006
      %v1008 = vadd.f32 %v1004, %v1007
      %vm1009 = vweird.f32 %v595
      %vm1010 = vweird.f32 %v1004
      %vm1011 = vmor %vm1009, %vm1010
      %v1012 = vsel %vm1011, %v1004, %v1008
      %v1013 = vand.u32 2147483647, %v595
      %vm1014 = vcmp.eq.f32.partialorder %v1013, 8.507059e+37
      %v1015 = vand.u32 %v595, 2147483648
      %v1016 = vor.u32 1.1754944e-38, %v1015
      %v1017 = vsel %vm1014, %v1016, %v1012
      %v1018 = vrcp.pop %v596
      %v1019 = vmul.f32 %v596, %v1018
      %v1020 = vsub.f32 1.0, %v1019
      %v1021 = vmul.f32 %v1018, %v1020
      %v1022 = vadd.f32 %v1018, %v1021
      %vm1023 = vweird.f32 %v596
      %vm1024 = vweird.f32 %v1018
      %vm1025 = vmor %vm1023, %vm1024
      %v1026 = vsel %vm1025, %v1018, %v1022
      %v1027 = vand.u32 2147483647, %v596
      %vm1028 = vcmp.eq.f32.partialorder %v1027, 8.507059e+37
      %v1029 = vand.u32 %v596, 2147483648
      %v1030 = vor.u32 1.1754944e-38, %v1029
      %v1031 = vsel %vm1028, %v1030, %v1026
      %v1032 = vrcp.pop %v597
      %v1033 = vmul.f32 %v597, %v1032
      %v1034 = vsub.f32 1.0, %v1033
      %v1035 = vmul.f32 %v1032, %v1034
      %v1036 = vadd.f32 %v1032, %v1035
      %vm1037 = vweird.f32 %v597
      %vm1038 = vweird.f32 %v1032
      %vm1039 = vmor %vm1037, %vm1038
      %v1040 = vsel %vm1039, %v1032, %v1036
      %v1041 = vand.u32 2147483647, %v597
      %vm1042 = vcmp.eq.f32.partialorder %v1041, 8.507059e+37
      %v1043 = vand.u32 %v597, 2147483648
      %v1044 = vor.u32 1.1754944e-38, %v1043
      %v1045 = vsel %vm1042, %v1044, %v1040
      %v1046 = vmul.f32 %v391, %v611
      %v1047 = vmul.f32 %v393, %v625
      %v1048 = vmul.f32 %v396, %v639
      %v1049 = vmul.f32 %v398, %v653
      %v1050 = vmul.f32 %v401, %v667
      %v1051 = vmul.f32 %v403, %v681
      %v1052 = vmul.f32 %v406, %v695
      %v1053 = vmul.f32 %v408, %v709
      %v1054 = vmul.f32 %v411, %v723
      %v1055 = vmul.f32 %v413, %v737
      %v1056 = vmul.f32 %v416, %v751
      %v1057 = vmul.f32 %v418, %v765
      %v1058 = vmul.f32 %v421, %v779
      %v1059 = vmul.f32 %v423, %v793
      %v1060 = vmul.f32 %v426, %v807
      %v1061 = vmul.f32 %v428, %v821
      %v1062 = vmul.f32 %v431, %v835
      %v1063 = vmul.f32 %v433, %v849
      %v1064 = vmul.f32 %v436, %v863
      %v1065 = vmul.f32 %v438, %v877
      %v1066 = vmul.f32 %v441, %v891
      %v1067 = vmul.f32 %v443, %v905
      %v1068 = vmul.f32 %v446, %v919
      %v1069 = vmul.f32 %v448, %v933
      %v1070 = vmul.f32 %v451, %v947
      %v1071 = vmul.f32 %v453, %v961
      %v1072 = vmul.f32 %v456, %v975
      %v1073 = vmul.f32 %v458, %v989
      %v1074 = vmul.f32 %v461, %v1003
      %v1075 = vmul.f32 %v463, %v1017
      %v1076 = vmul.f32 %v466, %v1031
      %v1077 = vmul.f32 %v468, %v1045
      %1078 = vst [vmem:[%s208] sm:$0xff] %v1046
      %1079 = vst [vmem:[%s208 + $0x8] sm:$0xff] %v1047
      %1080 = vst [vmem:[%s208 + $0x10] sm:$0xff] %v1048
      %1081 = vst [vmem:[%s208 + $0x18] sm:$0xff] %v1049
      %1082 = vst [vmem:[%s208 + $0x20] sm:$0xff] %v1050
      %1083 = vst [vmem:[%s208 + $0x28] sm:$0xff] %v1051
      %1084 = vst [vmem:[%s208 + $0x30] sm:$0xff] %v1052
      %1085 = vst [vmem:[%s208 + $0x38] sm:$0xff] %v1053
      %1086 = vst [vmem:[%s208 + $0x40] sm:$0xff] %v1054
      %1087 = vst [vmem:[%s208 + $0x48] sm:$0xff] %v1055
      %1088 = vst [vmem:[%s208 + $0x50] sm:$0xff] %v1056
      %1089 = vst [vmem:[%s208 + $0x58] sm:$0xff] %v1057
      %1090 = vst [vmem:[%s208 + $0x60] sm:$0xff] %v1058
      %1091 = vst [vmem:[%s208 + $0x68] sm:$0xff] %v1059
      %1092 = vst [vmem:[%s208 + $0x70] sm:$0xff] %v1060
      %1093 = vst [vmem:[%s208 + $0x78] sm:$0xff] %v1061
      %1094 = vst [vmem:[%s208 + $0x80] sm:$0xff] %v1062
      %1095 = vst [vmem:[%s208 + $0x88] sm:$0xff] %v1063
      %1096 = vst [vmem:[%s208 + $0x90] sm:$0xff] %v1064
      %1097 = vst [vmem:[%s208 + $0x98] sm:$0xff] %v1065
      %1098 = vst [vmem:[%s208 + $0xa0] sm:$0xff] %v1066
      %1099 = vst [vmem:[%s208 + $0xa8] sm:$0xff] %v1067
      %1100 = vst [vmem:[%s208 + $0xb0] sm:$0xff] %v1068
      %1101 = vst [vmem:[%s208 + $0xb8] sm:$0xff] %v1069
      %1102 = vst [vmem:[%s208 + $0xc0] sm:$0xff] %v1070
      %1103 = vst [vmem:[%s208 + $0xc8] sm:$0xff] %v1071
      %1104 = vst [vmem:[%s208 + $0xd0] sm:$0xff] %v1072
      %1105 = vst [vmem:[%s208 + $0xd8] sm:$0xff] %v1073
      %1106 = vst [vmem:[%s208 + $0xe0] sm:$0xff] %v1074
      %1107 = vst [vmem:[%s208 + $0xe8] sm:$0xff] %v1075
      %1108 = vst [vmem:[%s208 + $0xf0] sm:$0xff] %v1076
      %1109 = vst [vmem:[%s208 + $0xf8] sm:$0xff] %v1077
      %s1110 = smul.u32 32, %s19
      %p1111 = scmp.lt.s32.totalorder %s18, 1
      %s1112 = scalar_select %p1111, %s18, 1
      %p1113 = scmp.lt.s32.totalorder %s1110, 31
      %s1114 = scalar_select %p1113, %s1110, 31
      %s1115 = smul.addr %s1112, 32
      %s1116 = sadd.s32 %s1114, %s1115
      %s1117 = smul.addr %s1116, 8
      %s1118 = scalar_lea.vmem %s3, %s1117
      // Predicated region
      $region33: #{conv_bn_silu.1} parent=31 // pred_check
        %p1119 = pneg %p116
      $region34: #{conv_bn_silu.1} parent=31 // pred_check_branch
        %1121 = sbr.rel (%p1119) target = $region36
      $region35: #{conv_bn_silu.1} parent=31 // pred_region
        %s1122 = smul.u32 32, %s19
      $region36: #{conv_bn_silu.1} parent=31 // pred_fallthru
        _
    $region32: #{conv_bn_silu.1} parent=5 // pred_fallthru
      _
    %p1123 = scmp.le.s32.totalorder 2, %s9
    // Predicated region
    $region37: #{conv_bn_silu.1} parent=5 // pred_check
      %p1124 = pneg %p1123
    $region38: #{conv_bn_silu.1} parent=5 // pred_check_branch
      %1126 = sbr.rel (%p1124) target = $region40
    $region39: #{conv_bn_silu.1} parent=5 // pred_region
      %s1127 = ssub.s32 %s9, 2
      // Predicated region
      $region41: #{conv_bn_silu.1} parent=39 // pred_check
        %p1128 = pneg %p122
      $region42: #{conv_bn_silu.1} parent=39 // pred_check_branch
        %1130 = sbr.rel (%p1128) target = $region44
      $region43: #{conv_bn_silu.1} parent=39 // pred_region
        %s1131 = smul.u32 32, %s21
        %p1132 = scmp.lt.s32.totalorder %s20, 1
        %s1133 = scalar_select %p1132, %s20, 1
        %p1134 = scmp.lt.s32.totalorder %s1131, 31
        %s1135 = scalar_select %p1134, %s1131, 31
        %s1136 = smul.addr %s1133, 32
        %s1137 = sadd.s32 %s1135, %s1136
        %s1138 = smul.addr %s1137, 8
        %s1139 = scalar_lea.vmem %s3, %s1138
      $region44: #{conv_bn_silu.1} parent=39 // pred_fallthru
        _
    $region40: #{conv_bn_silu.1} parent=5 // pred_fallthru
      _
  $region6: #{conv_bn_silu.1} parent=0 // loop_footer
    %s13 = sadd.s32 1, %s9
  $region7: #{conv_bn_silu.1} parent=0 // loop_footer_branch
    %8 = sbr.rel target = $region3
  $region8: #{conv_bn_silu.1} parent=0 // loop_exit
    _

</llo_original>
